<compile_context>
chip_gen: v6e
topology: v6e:2x2x1
jax: 0.10.0
libtpu: 0.0.40
codegen_flags: <defaults>
</compile_context>

<pallas_src>
import random

import jax
import jax.numpy as jnp
from jax.experimental import pallas as pl
from jax.experimental.pallas import tpu as pltpu


_MIN_SUBLANES = {4: 8, 2: 16, 1: 32}     # min rows for a full-sublane tile
_MIN_PALLAS_BYTES = 1 << 20              # below this, plain jnp.where wins


# --------------------------------------------------------------------------
# Kernel
# --------------------------------------------------------------------------
def _solarize_kernel(thr_ref, x_ref, o_ref):
    # Threshold arrives as an f32 SMEM scalar; cast it once to the input dtype
    # so bf16/fp16 inputs keep abs/compare/select in native 16-bit width.
    t = thr_ref[0].astype(x_ref.dtype)
    x = x_ref[...]
    o_ref[...] = jnp.where(jnp.abs(x) > t, 1 - x, x)


# --------------------------------------------------------------------------
# Planning helpers (host-side, shape/dtype/device dependent only)
# --------------------------------------------------------------------------
def _device_kind():
    try:
        return jax.devices()[0].device_kind.lower()
    except Exception:  # pragma: no cover - defensive (e.g. no devices yet)
        return ""


def _target_block_bytes():
    # ~2 MiB blocks keep the 4x live footprint (in+out, double buffered) under
    # v5e's 16 MiB scoped-VMEM default; v6e/v7x get ~4 MiB blocks (16 MiB live)
    # which sits on the HBM-roofline plateau and halves per-step grid overhead.
    kind = _device_kind()
    if ("v6" in kind) or ("v7" in kind):
        return 4 * 1024 * 1024
    return 2 * 1024 * 1024


def _use_core_parallel():
    # Only v7x has 2 TensorCores per chip worth sharding the grid across.
    return "v7" in _device_kind()


def _plan_layout(total, itemsize, target_bytes):
    """Pick (lane, main, rows, block_rows) for a full-sublane lane-dense slab.

    Returns None if the input is too small for even one full (min_sub, 128)
    tile (caller falls back to plain jnp.where).
    """
    min_sub = _MIN_SUBLANES.get(itemsize, 8)

    lane = None
    for cand in (1024, 512, 256, 128):
        # Skip lane widths that would leave fewer than min_sub rows: a
        # (1..min_sub-1, lane) tile forces masked vst.msk partial stores.
        if total // cand >= min_sub:
            lane = cand
            break
    if lane is None:
        return None

    main = (total // lane) * lane          # largest lane-aligned prefix
    rows = main // lane                    # >= min_sub by construction

    # Block rows: target ~target_bytes per block, multiple of min_sub so every
    # non-edge tile is made of full (min_sub, lane) vregs.
    tr = (target_bytes // (lane * itemsize)) // min_sub * min_sub
    tr = max(min_sub, min(tr, (rows // min_sub) * min_sub))
    return lane, main, rows, tr


# --------------------------------------------------------------------------
# pallas_call wrapper
# --------------------------------------------------------------------------
def _call_kernel(x2d, thr, tr, core_parallel, donate_input):
    rows, lane = x2d.shape
    itemsize = jnp.dtype(x2d.dtype).itemsize
    block_bytes = tr * lane * itemsize
    # Live footprint is ~4 x block (in + out, double buffered); add headroom.
    vmem_limit = max(16 * 1024 * 1024, 5 * block_bytes)

    sem = (pltpu.CORE_PARALLEL if core_parallel else pltpu.PARALLEL,)

    kwargs = dict(
        out_shape=jax.ShapeDtypeStruct((rows, lane), x2d.dtype),
        grid=(pl.cdiv(rows, tr),),
        in_specs=[
            # Runtime scalar threshold in SMEM (no recompile per threshold).
            pl.BlockSpec(memory_space=pltpu.MemorySpace.SMEM),
            pl.BlockSpec((tr, lane), lambda i: (i, 0)),
        ],
        out_specs=pl.BlockSpec((tr, lane), lambda i: (i, 0)),
        compiler_params=pltpu.CompilerParams(
            dimension_semantics=sem,
            vmem_limit_bytes=vmem_limit,
        ),
    )
    if donate_input:
        # Only worthwhile when the caller actually donates x (e.g. inside a
        # larger jitted augmentation pipeline); otherwise XLA copies.
        kwargs["input_output_aliases"] = {1: 0}

    return pl.pallas_call(_solarize_kernel, **kwargs)(thr, x2d)


def _run_kernel(x2d, thr, tr, donate_input):
    if _use_core_parallel():
        try:
            return _call_kernel(x2d, thr, tr, True, donate_input)
        except Exception:
            # Conservative fallback if CORE_PARALLEL is rejected on this part.
            pass
    return _call_kernel(x2d, thr, tr, False, donate_input)


def solarize_pallas(x, threshold=0.5, *, force_pallas=False, donate_input=False):
    """where(|x| > threshold, 1 - x, x) for float inputs of any shape."""
    orig_shape = x.shape
    orig_dtype = x.dtype
    if not jnp.issubdtype(orig_dtype, jnp.floating):
        # TODO(synk): integer "classic" solarize (255 - x for uint8) is not the
        # semantics of this module (it assumes normalized float input).
        raise TypeError(f"solarize_pallas expects a float input, got {orig_dtype}")

    total = x.size
    itemsize = jnp.dtype(orig_dtype).itemsize

    # Small-input fast path: pallas_call fixed cost dominates; XLA's fused
    # elementwise is already at the HBM roofline and fuses with neighbors.
    plan = _plan_layout(total, itemsize, _target_block_bytes())
    if (not force_pallas and total * itemsize < _MIN_PALLAS_BYTES) or plan is None:
        t = jnp.asarray(threshold, orig_dtype)
        return jnp.where(jnp.abs(x) > t, 1 - x, x)

    lane, main, rows, tr = plan
    thr = jnp.asarray(threshold, jnp.float32).reshape(1)
    flat = x.reshape(-1)

    if main == total:
        # Common case (element count multiple of 128): no pad, no slice.
        out2d = _run_kernel(flat.reshape(rows, lane), thr, tr, donate_input)
        return out2d.reshape(orig_shape)

    # Rare odd-sized case: kernel on the largest lane-aligned prefix, tiny
    # (< lane elements) tail via plain jnp.where, then stitch.
    head2d = flat[:main].reshape(rows, lane)
    out_head = _run_kernel(head2d, thr, tr, donate_input).reshape(-1)
    tail = flat[main:]
    t = jnp.asarray(threshold, orig_dtype)
    out_tail = jnp.where(jnp.abs(tail) > t, 1 - tail, tail)
    return jnp.concatenate([out_head, out_tail]).reshape(orig_shape)


class SolarizeAugmentation:
    """JAX/Pallas port of the PyTorch SolarizeAugmentation module."""

    def __init__(self, p=0.3, threshold=0.5, prob_label=False, seed=0):
        self.prob = p
        self.threshold = threshold
        self.prob_label = prob_label
        # TODO(synk): the original uses global `random.random()`; a seeded
        # host-side coin flip keeps this example deterministic.
        self._rng = random.Random(seed)

    def __call__(self, x, y):
        x_aug, y_aug = x, y
        if self._rng.random() <= self.prob:
            x_aug = solarize_pallas(x_aug, threshold=self.threshold)
        return x_aug, y_aug


if __name__ == "__main__":
    key = jax.random.PRNGKey(0)
    kx, ky, kz = jax.random.split(key, 3)

    # Small NCHW input consistent with a pixel-level augmentation.
    x = jax.random.normal(kx, (2, 4, 16, 16), dtype=jnp.float32)
    y = jax.random.randint(ky, (2,), 0, 10, dtype=jnp.int32)

    # 1) Exercise the kernel path (f32, lane-aligned element count).
    x_sol = solarize_pallas(x, threshold=0.5, force_pallas=True)
    jax.block_until_ready(x_sol)
    ref = jnp.where(jnp.abs(x) > 0.5, 1.0 - x, x)
    assert jnp.allclose(x_sol, ref, atol=1e-6), "mismatch vs reference (f32)"

    # 2) Odd element count: lane-aligned prefix through the kernel + tail path.
    x_odd = jax.random.normal(kz, (2, 3, 15, 17), dtype=jnp.float32)
    x_odd_sol = solarize_pallas(x_odd, threshold=0.25, force_pallas=True)
    jax.block_until_ready(x_odd_sol)
    ref_odd = jnp.where(jnp.abs(x_odd) > 0.25, 1.0 - x_odd, x_odd)
    assert jnp.allclose(x_odd_sol, ref_odd, atol=1e-6), "mismatch (odd shape)"

    # 3) bf16 input: threshold cast keeps compute in native 16-bit width.
    xb = x.astype(jnp.bfloat16)
    xb_sol = solarize_pallas(xb, threshold=0.5, force_pallas=True)
    jax.block_until_ready(xb_sol)
    ref_b = jnp.where(jnp.abs(xb) > jnp.asarray(0.5, jnp.bfloat16), 1 - xb, xb)
    assert jnp.allclose(
        xb_sol.astype(jnp.float32), ref_b.astype(jnp.float32), atol=1e-2
    ), "mismatch (bf16)"

    # 4) Module-style wrapper (probabilistic branch, y passthrough).
    aug = SolarizeAugmentation(p=1.0, threshold=0.5, seed=0)
    x_out, y_out = aug(x, y)
    jax.block_until_ready(x_out)
    assert jnp.allclose(x_out, ref, atol=1e-6), "module wrapper mismatch"
    assert y_out is y

    print("KERNEL_OK")
</pallas_src>

<mosaic_0001>
module attributes {stable_mosaic.version = 11 : i64} {
  func.func @_solarize_kernel(%arg0: i32, %arg1: memref<1xf32, #tpu.memory_space<smem>>, %arg2: memref<8x256xf32, #tpu.memory_space<vmem>>, %arg3: memref<8x256xf32, #tpu.memory_space<vmem>>) attributes {dimension_semantics = [#tpu.dimension_semantics<parallel>], iteration_bounds = array<i64: 1>, scalar_prefetch = 0 : i64, scratch_operands = 0 : i64, tpu.core_type = #tpu.core_type<tc>, window_params = [{transform_indices = @transform_0, window_bounds = array<i64: 1>}, {transform_indices = @transform_1, window_bounds = array<i64: 8, 256>}, {transform_indices = @transform_2, window_bounds = array<i64: 8, 256>}]} {
    %c0 = arith.constant 0 : index
    %0 = memref.load %arg1[%c0] : memref<1xf32, #tpu.memory_space<smem>>
    %c0_0 = arith.constant 0 : index
    %c0_1 = arith.constant 0 : index
    %1 = vector.load %arg2[%c0_0, %c0_1] : memref<8x256xf32, #tpu.memory_space<vmem>>, vector<8x256xf32>
    %2 = math.absf %1 : vector<8x256xf32>
    %3 = vector.broadcast %0 : f32 to vector<8x256xf32>
    %4 = arith.cmpf ogt, %2, %3 : vector<8x256xf32>
    %cst = arith.constant 1.000000e+00 : f32
    %5 = vector.broadcast %cst : f32 to vector<8x256xf32>
    %6 = arith.subf %5, %1 : vector<8x256xf32>
    %7 = arith.select %4, %6, %1 : vector<8x256xi1>, vector<8x256xf32>
    %c0_2 = arith.constant 0 : index
    %c0_3 = arith.constant 0 : index
    %8 = vector.load %arg3[%c0_2, %c0_3] : memref<8x256xf32, #tpu.memory_space<vmem>>, vector<8x256xf32>
    tpu.vector_store %arg3[%c0_2, %c0_3], %7 {strides = array<i32>} : memref<8x256xf32, #tpu.memory_space<vmem>>, vector<8x256xf32>,
    return
  }
  func.func @transform_0(%arg0: i32) -> i32 {
    %c0_i32 = arith.constant 0 : i32
    %c0_i32_0 = arith.constant 0 : i32
    return %c0_i32 : i32
  }
  func.func @transform_1(%arg0: i32) -> (i32, i32) {
    %c0_i32 = arith.constant 0 : i32
    %c0_i32_0 = arith.constant 0 : i32
    return %arg0, %c0_i32 : i32, i32
  }
  func.func @transform_2(%arg0: i32) -> (i32, i32) {
    %c0_i32 = arith.constant 0 : i32
    %c0_i32_0 = arith.constant 0 : i32
    return %arg0, %c0_i32 : i32, i32
  }
}

</mosaic_0001>

<llo_original>
// kernel: tpu_custom_call.1
$region0: #{tpu_custom_call.1}
  #allocation0 [shape = 'u32[]', space=smem, size = 0x4, offset = 0x4, fixed_abs, tag = 'smem constant byte address 0x4 - core index']
  #allocation1 [shape = 'u32[144,128]{1,0:T(1,128)}', space=vmem, size = 0x12000, scoped, tag = 'internal scratch']
  #allocation2 [shape = 'f32[1]{0:T(128)S(6)}', space=smem, size = 0x200, scoped, tag = 'scoped memory for tpu_custom_call.1']
  %s0 = inlined_call_operand.<no memory space> [shape: f32[1], index: 0, kind: input, shape index: {}]
  %s1 = inlined_call_operand.hbm [shape: f32[8,256], index: 1, kind: input, shape index: {}]
  %s2 = inlined_call_operand.hbm [shape: f32[8,256], index: 2, kind: output, shape index: {}]
  %s3 = sld [smem:[#allocation0]]
  $region22: #{tpu_custom_call.1} parent=0
    _
  %s5 = ssub.s32 1, %s3
  %s6 = scalar_select 0, %s5, %s3
  %7 = sst [smem:[#allocation2]] %s0
  $region1: #{tpu_custom_call.1} parent=0
    #allocation3 [shape = 'u8[8192]{0}', space=vmem, size = 0x2000, scoped, tag = 'input window, operand 1, single buffered']
    #allocation4 [shape = 's32[1]{0}', space=sflag, size = 0x4, scoped, tag = 'scoped memory for tpu_custom_call.1']
    #allocation5 [shape = 's32[1]{0}', space=sflag, size = 0x4, scoped, tag = 'scoped memory for tpu_custom_call.1']
    #allocation6 [shape = 'u8[8192]{0}', space=vmem, size = 0x2000, scoped, tag = 'output window, operand 0, single buffered']
    %8 = vsyncpa [#allocation4], 0
    %9 = vsyncpa [#allocation5], 0
    // Predicated region
    $region2: #{tpu_custom_call.1} parent=1 // pred_check
      _
    $region3: #{tpu_custom_call.1} parent=1 // pred_check_branch
      %11 = sbr.rel (0) target = $region5
    $region4: #{tpu_custom_call.1} parent=1 // pred_region
      _
    $region5: #{tpu_custom_call.1} parent=1 // pred_fallthru
      _
    // Predicated region
    $region6: #{tpu_custom_call.1} parent=1 // pred_check
      _
    $region7: #{tpu_custom_call.1} parent=1 // pred_check_branch
      %13 = sbr.rel (0) target = $region9
    $region8: #{tpu_custom_call.1} parent=1 // pred_region
      %s15 = ssub.s32 256, 256
      %16 = vsyncadd [#allocation4], %s15
      %s18 = sshll.u32 [#allocation3], 4
      %s19 = int_to_ptr.vmem [resolvable:$true] %s18
      %21 = dma.hbm_to_vmem [thread:$0]  %s1, 256, %s19, [#allocation4]
    $region9: #{tpu_custom_call.1} parent=1 // pred_fallthru
      _
    // Predicated region
    $region10: #{tpu_custom_call.1} parent=1 // pred_check
      _
    $region11: #{tpu_custom_call.1} parent=1 // pred_check_branch
      %23 = sbr.rel (0) target = $region13
    $region12: #{tpu_custom_call.1} parent=1 // pred_region
      %24 = dma.done [#allocation4], 256
    $region13: #{tpu_custom_call.1} parent=1 // pred_fallthru
      _
    %s25 = sld [smem:[#allocation2]]
    %v26 = vld [vmem:[#allocation3] sm:$0xff]
    %v27 = vld [vmem:[#allocation3 + $0x8] sm:$0xff]
    %v28 = vand.u32 2147483647, %v26
    %v29 = vand.u32 2147483647, %v27
    %v30 = vstv %s25
    %vm31 = vcmp.gt.f32.partialorder %v28, %v30
    %vm32 = vcmp.gt.f32.partialorder %v29, %v30
    %v33 = vsub.f32 1.0, %v26
    %v34 = vsub.f32 1.0, %v27
    %v35 = vsel %vm31, %v33, %v26
    %v36 = vsel %vm32, %v34, %v27
    %37 = vst [vmem:[#allocation6] sm:$0xff] %v35
    %38 = vst [vmem:[#allocation6 + $0x8] sm:$0xff] %v36
    // Predicated region
    $region14: #{tpu_custom_call.1} parent=1 // pred_check
      _
    $region15: #{tpu_custom_call.1} parent=1 // pred_check_branch
      %40 = sbr.rel (0) target = $region17
    $region16: #{tpu_custom_call.1} parent=1 // pred_region
      %s42 = ssub.s32 256, 256
      %43 = vsyncadd [#allocation5], %s42
      %s45 = sshll.u32 [#allocation6], 4
      %s46 = int_to_ptr.vmem [resolvable:$true] %s45
      %48 = dma.vmem_to_hbm [thread:$0]  %s46, 256, %s2, [#allocation5]
    $region17: #{tpu_custom_call.1} parent=1 // pred_fallthru
      _
    // Predicated region
    $region18: #{tpu_custom_call.1} parent=1 // pred_check
      _
    $region19: #{tpu_custom_call.1} parent=1 // pred_check_branch
      %50 = sbr.rel (0) target = $region21
    $region20: #{tpu_custom_call.1} parent=1 // pred_region
      %51 = dma.done [#allocation5], 256
    $region21: #{tpu_custom_call.1} parent=1 // pred_fallthru
      _
    %52 = vsyncpa [#allocation4], 1
    %53 = vsyncpa [#allocation5], 1

</llo_original>
